<compile_context>
chip_gen: v6e
topology: v6e:2x2x1
jax: 0.10.0
libtpu: 0.0.40
codegen_flags: <defaults>
</compile_context>

<pallas_src>
import functools

import jax
import jax.numpy as jnp
import numpy as np
from jax.experimental import pallas as pl
from jax.experimental.pallas import tpu as pltpu

BN_EPS = 1e-5


def _round_up(x, m):
    return ((x + m - 1) // m) * m


def _mlp_head_kernel(x_ref, w1_ref, gamma_ref, beta_ref, w2_ref, b2_ref,
                     o_ref, acc_ref, *, inv_batch):
    """One hidden-tile step: Linear1 -> BN(batch stats) -> ReLU -> partial Linear2."""
    k = pl.program_id(0)

    @pl.when(k == 0)
    def _():
        acc_ref[...] = jnp.zeros_like(acc_ref)

    # ---- Linear 1 (bias omitted: cancelled exactly by BN mean subtraction) ----
    # bf16 operands, f32 accumulation on the MXU.
    h = jnp.dot(x_ref[...], w1_ref[...],
                preferred_element_type=jnp.float32)          # (B, tile_h) f32

    # ---- BatchNorm1d (training mode, biased batch stats), one-pass moments ----
    s1 = jnp.sum(h, axis=0, keepdims=True)
    s2 = jnp.sum(h * h, axis=0, keepdims=True)
    mean = s1 * inv_batch
    var = jnp.maximum(s2 * inv_batch - mean * mean, 0.0)
    h_hat = (h - mean) * jax.lax.rsqrt(var + BN_EPS)
    h_bn = h_hat * gamma_ref[...] + beta_ref[...]

    # ---- ReLU ----
    h_relu = jnp.maximum(h_bn, 0.0)

    # ---- Linear 2 partial contribution, accumulated in f32 scratch ----
    acc_ref[...] += jnp.dot(h_relu.astype(jnp.bfloat16), w2_ref[...],
                            preferred_element_type=jnp.float32)

    @pl.when(k == pl.num_programs(0) - 1)
    def _():
        o_ref[...] = (acc_ref[...] + b2_ref[...]).astype(o_ref.dtype)


@functools.partial(jax.jit, static_argnames=("tile_h",))
def mlp_head_forward(x, w1, b1, gamma, beta, w2, b2, *, tile_h=512):
    """x: (B, Cin) float32. Returns (B, projection_size) float32.

    b1 is accepted (module has it) but not used in the kernel: with
    training-mode BatchNorm right after the Linear, the bias is exactly
    cancelled by the mean subtraction.
    """
    del b1
    B, C = x.shape
    H = w1.shape[1]
    P = w2.shape[1]

    # Lane-dense padded dims (multiples of 128). Batch is NOT padded/tiled:
    # BN statistics must cover the full, real batch.
    c_pad = max(_round_up(C, 128), 128)
    p_pad = max(_round_up(P, 128), 128)
    th = min(int(tile_h), max(_round_up(H, 128), 128))
    th = max(_round_up(th, 128), 128)
    h_pad = _round_up(H, th)
    n_htiles = h_pad // th

    # Zero-padding is inert: padded Cin rows contribute 0 to Linear-1; padded
    # hidden features produce h == 0 -> h_hat == 0 -> ReLU 0 -> 0 contribution
    # to Linear-2; padded projection columns are sliced off below.
    xb = jnp.zeros((B, c_pad), jnp.bfloat16).at[:, :C].set(x.astype(jnp.bfloat16))
    w1b = jnp.zeros((c_pad, h_pad), jnp.bfloat16).at[:C, :H].set(w1.astype(jnp.bfloat16))
    w2b = jnp.zeros((h_pad, p_pad), jnp.bfloat16).at[:H, :P].set(w2.astype(jnp.bfloat16))
    g = jnp.zeros((1, h_pad), jnp.float32).at[:, :H].set(gamma.reshape(1, H))
    bt = jnp.zeros((1, h_pad), jnp.float32).at[:, :H].set(beta.reshape(1, H))
    b2p = jnp.zeros((1, p_pad), jnp.float32).at[:, :P].set(b2.reshape(1, P))

    cost = pl.CostEstimate(
        flops=int(2 * B * (c_pad * h_pad + h_pad * p_pad)),
        transcendentals=int(h_pad),
        bytes_accessed=int(xb.size * 2 + w1b.size * 2 + w2b.size * 2
                           + (g.size + bt.size + b2p.size) * 4 + B * p_pad * 4),
    )

    kernel = functools.partial(_mlp_head_kernel, inv_batch=float(1.0 / B))

    out_pad = pl.pallas_call(
        kernel,
        out_shape=jax.ShapeDtypeStruct((B, p_pad), jnp.float32),
        grid_spec=pltpu.PrefetchScalarGridSpec(
            num_scalar_prefetch=0,
            grid=(n_htiles,),
            in_specs=[
                pl.BlockSpec((B, c_pad), lambda k: (0, 0)),     # x (resident)
                pl.BlockSpec((c_pad, th), lambda k: (0, k)),    # w1 column tile
                pl.BlockSpec((1, th), lambda k: (0, k)),        # gamma tile
                pl.BlockSpec((1, th), lambda k: (0, k)),        # beta tile
                pl.BlockSpec((th, p_pad), lambda k: (k, 0)),    # w2 row tile
                pl.BlockSpec((1, p_pad), lambda k: (0, 0)),     # b2 (resident)
            ],
            out_specs=pl.BlockSpec((B, p_pad), lambda k: (0, 0)),
            scratch_shapes=[pltpu.VMEM((B, p_pad), jnp.float32)],
        ),
        compiler_params=pltpu.CompilerParams(
            dimension_semantics=("arbitrary",),
            vmem_limit_bytes=48 * 1024 * 1024,
        ),
        cost_estimate=cost,
    )(xb, w1b, g, bt, w2b, b2p)

    return out_pad[:, :P]


def init_params(key, in_channels, mlp_hidden_size, projection_size):
    """Deterministic PyTorch-style (uniform +-1/sqrt(fan_in)) init.

    Weights are stored as (in_features, out_features) so the kernel does
    x @ W directly (equivalent to PyTorch's x @ W.T with its (out, in) layout).
    """
    k1, k2, k3, k4 = jax.random.split(key, 4)
    lim1 = 1.0 / np.sqrt(in_channels)
    lim2 = 1.0 / np.sqrt(mlp_hidden_size)
    w1 = jax.random.uniform(k1, (in_channels, mlp_hidden_size),
                            jnp.float32, -lim1, lim1)
    b1 = jax.random.uniform(k2, (1, mlp_hidden_size), jnp.float32, -lim1, lim1)
    gamma = jnp.ones((1, mlp_hidden_size), jnp.float32)   # BN weight
    beta = jnp.zeros((1, mlp_hidden_size), jnp.float32)   # BN bias
    w2 = jax.random.uniform(k3, (mlp_hidden_size, projection_size),
                            jnp.float32, -lim2, lim2)
    b2 = jax.random.uniform(k4, (1, projection_size), jnp.float32, -lim2, lim2)
    return w1, b1, gamma, beta, w2, b2


def reference_forward(x, w1, b1, gamma, beta, w2, b2):
    """Pure-f32 PyTorch (training-mode) semantics, including b1."""
    h = x @ w1 + b1
    mean = jnp.mean(h, axis=0, keepdims=True)
    var = jnp.mean((h - mean) ** 2, axis=0, keepdims=True)
    h = (h - mean) / jnp.sqrt(var + BN_EPS) * gamma + beta
    h = jnp.maximum(h, 0.0)
    return h @ w2 + b2


if __name__ == "__main__":
    # Small BYOL-style shapes: batch=8, in_channels=32, hidden=64, proj=16
    B, C_IN, HID, PROJ = 8, 32, 64, 16

    key = jax.random.PRNGKey(0)
    kx, kp = jax.random.split(key)
    x = jax.random.normal(kx, (B, C_IN), jnp.float32)
    params = init_params(kp, C_IN, HID, PROJ)

    out = jax.block_until_ready(mlp_head_forward(x, *params))

    # Kernel uses bf16 MXU operands (f32 accumulation), so compare against the
    # full-f32 PyTorch reference with a bf16-appropriate tolerance.
    ref = reference_forward(x, *params)
    np.testing.assert_allclose(np.asarray(out), np.asarray(ref),
                               rtol=5e-2, atol=5e-2)
    assert out.shape == (B, PROJ)
    print("KERNEL_OK")
</pallas_src>

<mosaic_0001>
module attributes {stable_mosaic.version = 11 : i64} {
  func.func @_mlp_head_kernel(%arg0: i32, %arg1: memref<8x128xbf16, #tpu.memory_space<vmem>>, %arg2: memref<128x128xbf16, #tpu.memory_space<vmem>>, %arg3: memref<1x128xf32, #tpu.memory_space<vmem>>, %arg4: memref<1x128xf32, #tpu.memory_space<vmem>>, %arg5: memref<128x128xbf16, #tpu.memory_space<vmem>>, %arg6: memref<1x128xf32, #tpu.memory_space<vmem>>, %arg7: memref<8x128xf32, #tpu.memory_space<vmem>>, %arg8: memref<8x128xf32, #tpu.memory_space<vmem>>) attributes {dimension_semantics = [#tpu.dimension_semantics<arbitrary>], iteration_bounds = array<i64: 1>, scalar_prefetch = 0 : i64, scratch_operands = 1 : i64, tpu.core_type = #tpu.core_type<tc>, window_params = [{pipeline_mode = #tpu.pipeline_mode<synchronous>, transform_indices = @transform_0, window_bounds = array<i64: 8, 128>}, {transform_indices = @transform_1, window_bounds = array<i64: 128, 128>}, {transform_indices = @transform_2, window_bounds = array<i64: 1, 128>}, {transform_indices = @transform_3, window_bounds = array<i64: 1, 128>}, {transform_indices = @transform_4, window_bounds = array<i64: 128, 128>}, {pipeline_mode = #tpu.pipeline_mode<synchronous>, transform_indices = @transform_5, window_bounds = array<i64: 1, 128>}, {pipeline_mode = #tpu.pipeline_mode<synchronous>, transform_indices = @transform_6, window_bounds = array<i64: 8, 128>}]} {
    %c0_i32 = arith.constant 0 : i32
    %0 = arith.cmpi eq, %arg0, %c0_i32 : i32
    %1 = arith.extui %0 : i1 to i32
    %c0_i32_0 = arith.constant 0 : i32
    %2 = arith.cmpi ne, %1, %c0_i32_0 : i32
    scf.if %2 {
      %cst_24 = arith.constant 0.000000e+00 : f32
      %43 = vector.broadcast %cst_24 : f32 to vector<8x128xf32>
      %c0_25 = arith.constant 0 : index
      %c0_26 = arith.constant 0 : index
      %44 = vector.load %arg8[%c0_25, %c0_26] : memref<8x128xf32, #tpu.memory_space<vmem>>, vector<8x128xf32>
      tpu.vector_store %arg8[%c0_25, %c0_26], %43 {strides = array<i32>} : memref<8x128xf32, #tpu.memory_space<vmem>>, vector<8x128xf32>,
    } else {
    }
    %c0 = arith.constant 0 : index
    %c0_1 = arith.constant 0 : index
    %3 = vector.load %arg1[%c0, %c0_1] : memref<8x128xbf16, #tpu.memory_space<vmem>>, vector<8x128xbf16>
    %c0_2 = arith.constant 0 : index
    %c0_3 = arith.constant 0 : index
    %4 = vector.load %arg2[%c0_2, %c0_3] : memref<128x128xbf16, #tpu.memory_space<vmem>>, vector<128x128xbf16>
    %cst = arith.constant dense<0.000000e+00> : vector<8x128xf32>
    %5 = tpu.matmul %3, %4, %cst {dimension_numbers = #tpu.dot_dimension_numbers<[1], [0], [0], [1], [0, 0, 1, 1], [], []>} : vector<8x128xbf16>, vector<128x128xbf16>, vector<8x128xf32> -> vector<8x128xf32>
    %cst_4 = arith.constant dense<0.000000e+00> : vector<128xf32>
    %6 = vector.multi_reduction <add>, %5, %cst_4 [0] : vector<8x128xf32> to vector<128xf32>
    %7 = vector.shape_cast %6 : vector<128xf32> to vector<1x128xf32>
    %8 = arith.mulf %5, %5 : vector<8x128xf32>
    %cst_5 = arith.constant dense<0.000000e+00> : vector<128xf32>
    %9 = vector.multi_reduction <add>, %8, %cst_5 [0] : vector<8x128xf32> to vector<128xf32>
    %10 = vector.shape_cast %9 : vector<128xf32> to vector<1x128xf32>
    %cst_6 = arith.constant 1.250000e-01 : f32
    %11 = vector.broadcast %cst_6 : f32 to vector<1x128xf32>
    %12 = arith.mulf %7, %11 : vector<1x128xf32>
    %cst_7 = arith.constant 1.250000e-01 : f32
    %13 = vector.broadcast %cst_7 : f32 to vector<1x128xf32>
    %14 = arith.mulf %10, %13 : vector<1x128xf32>
    %15 = arith.mulf %12, %12 : vector<1x128xf32>
    %16 = arith.subf %14, %15 : vector<1x128xf32>
    %cst_8 = arith.constant 0.000000e+00 : f32
    %17 = vector.broadcast %cst_8 : f32 to vector<1x128xf32>
    %18 = arith.maximumf %16, %17 : vector<1x128xf32>
    %19 = vector.broadcast %12 : vector<1x128xf32> to vector<8x128xf32>
    %20 = arith.subf %5, %19 : vector<8x128xf32>
    %cst_9 = arith.constant 9.99999974E-6 : f32
    %21 = vector.broadcast %cst_9 : f32 to vector<1x128xf32>
    %22 = arith.addf %18, %21 : vector<1x128xf32>
    %23 = math.rsqrt %22 : vector<1x128xf32>
    %24 = vector.broadcast %23 : vector<1x128xf32> to vector<8x128xf32>
    %25 = arith.mulf %20, %24 : vector<8x128xf32>
    %c0_10 = arith.constant 0 : index
    %c0_11 = arith.constant 0 : index
    %26 = vector.load %arg3[%c0_10, %c0_11] : memref<1x128xf32, #tpu.memory_space<vmem>>, vector<1x128xf32>
    %27 = vector.broadcast %26 : vector<1x128xf32> to vector<8x128xf32>
    %28 = arith.mulf %25, %27 : vector<8x128xf32>
    %c0_12 = arith.constant 0 : index
    %c0_13 = arith.constant 0 : index
    %29 = vector.load %arg4[%c0_12, %c0_13] : memref<1x128xf32, #tpu.memory_space<vmem>>, vector<1x128xf32>
    %30 = vector.broadcast %29 : vector<1x128xf32> to vector<8x128xf32>
    %31 = arith.addf %28, %30 : vector<8x128xf32>
    %cst_14 = arith.constant 0.000000e+00 : f32
    %32 = vector.broadcast %cst_14 : f32 to vector<8x128xf32>
    %33 = arith.maximumf %31, %32 : vector<8x128xf32>
    %c0_15 = arith.constant 0 : index
    %c0_16 = arith.constant 0 : index
    %34 = vector.load %arg8[%c0_15, %c0_16] : memref<8x128xf32, #tpu.memory_space<vmem>>, vector<8x128xf32>
    %35 = arith.truncf %33 : vector<8x128xf32> to vector<8x128xbf16>
    %c0_17 = arith.constant 0 : index
    %c0_18 = arith.constant 0 : index
    %36 = vector.load %arg5[%c0_17, %c0_18] : memref<128x128xbf16, #tpu.memory_space<vmem>>, vector<128x128xbf16>
    %cst_19 = arith.constant dense<0.000000e+00> : vector<8x128xf32>
    %37 = tpu.matmul %35, %36, %cst_19 {dimension_numbers = #tpu.dot_dimension_numbers<[1], [0], [0], [1], [0, 0, 1, 1], [], []>} : vector<8x128xbf16>, vector<128x128xbf16>, vector<8x128xf32> -> vector<8x128xf32>
    %38 = arith.addf %34, %37 : vector<8x128xf32>
    %c0_20 = arith.constant 0 : index
    %c0_21 = arith.constant 0 : index
    %39 = vector.load %arg8[%c0_20, %c0_21] : memref<8x128xf32, #tpu.memory_space<vmem>>, vector<8x128xf32>
    tpu.vector_store %arg8[%c0_20, %c0_21], %38 {strides = array<i32>} : memref<8x128xf32, #tpu.memory_space<vmem>>, vector<8x128xf32>,
    %c0_i32_22 = arith.constant 0 : i32
    %40 = arith.cmpi eq, %arg0, %c0_i32_22 : i32
    %41 = arith.extui %40 : i1 to i32
    %c0_i32_23 = arith.constant 0 : i32
    %42 = arith.cmpi ne, %41, %c0_i32_23 : i32
    scf.if %42 {
      %c0_24 = arith.constant 0 : index
      %c0_25 = arith.constant 0 : index
      %43 = vector.load %arg8[%c0_24, %c0_25] : memref<8x128xf32, #tpu.memory_space<vmem>>, vector<8x128xf32>
      %c0_26 = arith.constant 0 : index
      %c0_27 = arith.constant 0 : index
      %44 = vector.load %arg6[%c0_26, %c0_27] : memref<1x128xf32, #tpu.memory_space<vmem>>, vector<1x128xf32>
      %45 = vector.broadcast %44 : vector<1x128xf32> to vector<8x128xf32>
      %46 = arith.addf %43, %45 : vector<8x128xf32>
      %c0_28 = arith.constant 0 : index
      %c0_29 = arith.constant 0 : index
      %47 = vector.load %arg7[%c0_28, %c0_29] : memref<8x128xf32, #tpu.memory_space<vmem>>, vector<8x128xf32>
      tpu.vector_store %arg7[%c0_28, %c0_29], %46 {strides = array<i32>} : memref<8x128xf32, #tpu.memory_space<vmem>>, vector<8x128xf32>,
    } else {
    }
    return
  }
  func.func @transform_0(%arg0: i32) -> (i32, i32) {
    %c0_i32 = arith.constant 0 : i32
    %c0_i32_0 = arith.constant 0 : i32
    %c0_i32_1 = arith.constant 0 : i32
    return %c0_i32, %c0_i32_0 : i32, i32
  }
  func.func @transform_1(%arg0: i32) -> (i32, i32) {
    %c0_i32 = arith.constant 0 : i32
    %c0_i32_0 = arith.constant 0 : i32
    return %c0_i32, %arg0 : i32, i32
  }
  func.func @transform_2(%arg0: i32) -> (i32, i32) {
    %c0_i32 = arith.constant 0 : i32
    %c0_i32_0 = arith.constant 0 : i32
    return %c0_i32, %arg0 : i32, i32
  }
  func.func @transform_3(%arg0: i32) -> (i32, i32) {
    %c0_i32 = arith.constant 0 : i32
    %c0_i32_0 = arith.constant 0 : i32
    return %c0_i32, %arg0 : i32, i32
  }
  func.func @transform_4(%arg0: i32) -> (i32, i32) {
    %c0_i32 = arith.constant 0 : i32
    %c0_i32_0 = arith.constant 0 : i32
    return %arg0, %c0_i32 : i32, i32
  }
  func.func @transform_5(%arg0: i32) -> (i32, i32) {
    %c0_i32 = arith.constant 0 : i32
    %c0_i32_0 = arith.constant 0 : i32
    %c0_i32_1 = arith.constant 0 : i32
    return %c0_i32, %c0_i32_0 : i32, i32
  }
  func.func @transform_6(%arg0: i32) -> (i32, i32) {
    %c0_i32 = arith.constant 0 : i32
    %c0_i32_0 = arith.constant 0 : i32
    %c0_i32_1 = arith.constant 0 : i32
    return %c0_i32, %c0_i32_0 : i32, i32
  }
}

</mosaic_0001>

<llo_original>
// kernel: mlp_head_forward.1
$region0: #{mlp_head_forward.1}
  #allocation0 [shape = 'u32[]', space=smem, size = 0x4, offset = 0x4, fixed_abs, tag = 'smem constant byte address 0x4 - core index']
  #allocation1 [shape = 'u32[144,128]{1,0:T(1,128)}', space=vmem, size = 0x12000, scoped, tag = 'internal scratch']
  #allocation2 [shape = 'f32[8,128]{1,0:T(8,128)}', space=vmem, size = 0x1000, scoped, tag = 'scratch operand']
  %s0 = inlined_call_operand.vmem [shape: bf16[8,128], index: 0, kind: input, shape index: {}]
  %s1 = inlined_call_operand.vmem [shape: bf16[128,128], index: 1, kind: input, shape index: {}]
  %s2 = inlined_call_operand.vmem [shape: f32[1,128], index: 2, kind: input, shape index: {}]
  %s3 = inlined_call_operand.vmem [shape: f32[1,128], index: 3, kind: input, shape index: {}]
  %s4 = inlined_call_operand.vmem [shape: bf16[128,128], index: 4, kind: input, shape index: {}]
  %s5 = inlined_call_operand.vmem [shape: f32[1,128], index: 5, kind: input, shape index: {}]
  %s6 = inlined_call_operand.hbm [shape: f32[8,128], index: 6, kind: output, shape index: {}]
  %s7 = sld [smem:[#allocation0]]
  $region42: #{mlp_head_forward.1} parent=0
    _
  %s9 = ssub.s32 1, %s7
  %s10 = scalar_select 0, %s9, %s7
  $region1: #{mlp_head_forward.1} parent=0
    #allocation3 [shape = 'u8[4096]{0}', space=vmem, size = 0x1000, scoped, tag = 'output window, operand 0, single buffered']
    #allocation4 [shape = 's32[1]{0}', space=sflag, size = 0x4, scoped, tag = 'scoped memory for mlp_head_forward.1']
    %11 = vsyncpa [#allocation4], 0
    // Predicated region
    $region2: #{mlp_head_forward.1} parent=1 // pred_check
      _
    $region3: #{mlp_head_forward.1} parent=1 // pred_check_branch
      %13 = sbr.rel (0) target = $region5
    $region4: #{mlp_head_forward.1} parent=1 // pred_region
      _
    $region5: #{mlp_head_forward.1} parent=1 // pred_fallthru
      _
    // Predicated region
    $region6: #{mlp_head_forward.1} parent=1 // pred_check
      _
    $region7: #{mlp_head_forward.1} parent=1 // pred_check_branch
      %15 = sbr.rel (0) target = $region9
    $region8: #{mlp_head_forward.1} parent=1 // pred_region
      _
    $region9: #{mlp_head_forward.1} parent=1 // pred_fallthru
      _
    // Predicated region
    $region10: #{mlp_head_forward.1} parent=1 // pred_check
      _
    $region11: #{mlp_head_forward.1} parent=1 // pred_check_branch
      %17 = sbr.rel (0) target = $region13
    $region12: #{mlp_head_forward.1} parent=1 // pred_region
      _
    $region13: #{mlp_head_forward.1} parent=1 // pred_fallthru
      _
    // Predicated region
    $region14: #{mlp_head_forward.1} parent=1 // pred_check
      _
    $region15: #{mlp_head_forward.1} parent=1 // pred_check_branch
      %19 = sbr.rel (0) target = $region17
    $region16: #{mlp_head_forward.1} parent=1 // pred_region
      _
    $region17: #{mlp_head_forward.1} parent=1 // pred_fallthru
      _
    // Predicated region
    $region18: #{mlp_head_forward.1} parent=1 // pred_check
      _
    $region19: #{mlp_head_forward.1} parent=1 // pred_check_branch
      %21 = sbr.rel (0) target = $region21
    $region20: #{mlp_head_forward.1} parent=1 // pred_region
      _
    $region21: #{mlp_head_forward.1} parent=1 // pred_fallthru
      _
    // Predicated region
    $region22: #{mlp_head_forward.1} parent=1 // pred_check
      _
    $region23: #{mlp_head_forward.1} parent=1 // pred_check_branch
      %23 = sbr.rel (0) target = $region25
    $region24: #{mlp_head_forward.1} parent=1 // pred_region
      _
    $region25: #{mlp_head_forward.1} parent=1 // pred_fallthru
      _
    %p25 = scmp.eq.s32.totalorder 0, 0
    // Predicated region
    $region26: #{mlp_head_forward.1} parent=1 // pred_check
      %p26 = pneg %p25
    $region27: #{mlp_head_forward.1} parent=1 // pred_check_branch
      %28 = sbr.rel (%p26) target = $region29
    $region28: #{mlp_head_forward.1} parent=1 // pred_region
      %29 = vst [vmem:[#allocation2] sm:$0xff] 0.0
    $region29: #{mlp_head_forward.1} parent=1 // pred_fallthru
      _
    %v30 = vld [vmem:[%s0] sm:$0xf]
    %v31 = vld [vmem:[%s1] sm:$0xf]
    %v32 = vld [vmem:[%s1 + $0x4] sm:$0xf]
    %v33 = vld [vmem:[%s1 + $0x8] sm:$0xf]
    %v34 = vld [vmem:[%s1 + $0xc] sm:$0xf]
    %v35 = vld [vmem:[%s1 + $0x10] sm:$0xf]
    %v36 = vld [vmem:[%s1 + $0x14] sm:$0xf]
    %v37 = vld [vmem:[%s1 + $0x18] sm:$0xf]
    %v38 = vld [vmem:[%s1 + $0x1c] sm:$0xf]
    %v39 = vld [vmem:[%s1 + $0x20] sm:$0xf]
    %v40 = vld [vmem:[%s1 + $0x24] sm:$0xf]
    %v41 = vld [vmem:[%s1 + $0x28] sm:$0xf]
    %v42 = vld [vmem:[%s1 + $0x2c] sm:$0xf]
    %v43 = vld [vmem:[%s1 + $0x30] sm:$0xf]
    %v44 = vld [vmem:[%s1 + $0x34] sm:$0xf]
    %v45 = vld [vmem:[%s1 + $0x38] sm:$0xf]
    %v46 = vld [vmem:[%s1 + $0x3c] sm:$0xf]
    %v63 = vunpack.c.l.b16 %v31
    %v64 = vunpack.c.l.b16 %v32
    %v65 = vunpack.c.l.b16 %v33
    %v66 = vunpack.c.l.b16 %v34
    %v67 = vunpack.c.l.b16 %v35
    %v68 = vunpack.c.l.b16 %v36
    %v69 = vunpack.c.l.b16 %v37
    %v70 = vunpack.c.l.b16 %v38
    %v71 = vunpack.c.l.b16 %v39
    %v72 = vunpack.c.l.b16 %v40
    %v73 = vunpack.c.l.b16 %v41
    %v74 = vunpack.c.l.b16 %v42
    %v75 = vunpack.c.l.b16 %v43
    %v76 = vunpack.c.l.b16 %v44
    %v77 = vunpack.c.l.b16 %v45
    %v78 = vunpack.c.l.b16 %v46
    %v79 = vpack.c.b16 %v64, %v63
    %v80 = vpack.c.b16 %v66, %v65
    %v81 = vpack.c.b16 %v68, %v67
    %v82 = vpack.c.b16 %v70, %v69
    %v83 = vpack.c.b16 %v72, %v71
    %v84 = vpack.c.b16 %v74, %v73
    %v85 = vpack.c.b16 %v76, %v75
    %v86 = vpack.c.b16 %v78, %v77
    %95 = vmatprep.subr.bf16.mxu0 0
    %96 = vmatpush1.bf16.msra.mxu0 %v86
    %97 = vmatprep.subr.bf16.mxu0 0
    %98 = vmatpush1.bf16.msra.mxu0 %v85
    %99 = vmatprep.subr.bf16.mxu0 0
    %100 = vmatpush1.bf16.msra.mxu0 %v84
    %101 = vmatprep.subr.bf16.mxu0 0
    %102 = vmatpush1.bf16.msra.mxu0 %v83
    %103 = vmatprep.subr.bf16.mxu0 0
    %104 = vmatpush1.bf16.msra.mxu0 %v82
    %105 = vmatprep.subr.bf16.mxu0 0
    %106 = vmatpush1.bf16.msra.mxu0 %v81
    %107 = vmatprep.subr.bf16.mxu0 0
    %108 = vmatpush1.bf16.msra.mxu0 %v80
    %109 = vmatprep.subr.bf16.mxu0 0
    %110 = vmatpush1.bf16.msra.mxu0 %v79
    %111 = vmatprep.subr.bf16.mxu0 0
    %112 = vmatpush2.bf16.msra.mxu0 0
    %113 = vmatprep.subr.bf16.mxu0 0
    %114 = vmatpush2.bf16.msra.mxu0 0
    %115 = vmatprep.subr.bf16.mxu0 0
    %116 = vmatpush2.bf16.msra.mxu0 0
    %117 = vmatprep.subr.bf16.mxu0 0
    %118 = vmatpush2.bf16.msra.mxu0 0
    %119 = vmatprep.subr.bf16.mxu0 0
    %120 = vmatpush2.bf16.msra.mxu0 0
    %121 = vmatprep.subr.bf16.mxu0 0
    %122 = vmatpush2.bf16.msra.mxu0 0
    %123 = vmatprep.subr.bf16.mxu0 0
    %124 = vmatpush2.bf16.msra.mxu0 0
    %125 = vmatprep.subr.bf16.mxu0 0
    %126 = vmatpush2.bf16.msra.mxu0 0
    %127 = vmatprep.mubr.bf16.mxu0 0
    %128 = vmatmul.mubr.bf16.gmra.mxu0 %v30
    %v129 = vpop.f32.mrf.mxu0
    %v130 = vadd.f32 0.0, %v129
    %v131 = vpop.f32.mrf.mxu0
    %v132 = vpop.f32.mrf.mxu0
    %v133 = vpop.f32.mrf.mxu0
    %134 = vdwg.mxu0
    %v135 = vrot.slane %v130, 4
    %v136 = vadd.f32 %v130, %v135
    %v137 = vrot.slane %v136, 2
    %v138 = vadd.f32 %v136, %v137
    %v139 = vrot.slane %v138, 1
    %v140 = vadd.f32 %v138, %v139
    %v141 = vmul.f32 %v130, %v130
    %v142 = vrot.slane %v141, 4
    %v143 = vadd.f32 %v141, %v142
    %v144 = vrot.slane %v143, 2
    %v145 = vadd.f32 %v143, %v144
    %v146 = vrot.slane %v145, 1
    %v147 = vadd.f32 %v145, %v146
    %v148 = vmul.f32 %v140, 0.125
    %v149 = vmul.f32 %v147, 0.125
    %v150 = vmul.f32 %v148, %v148
    %v151 = vsub.f32 %v149, %v150
    %v152 = vmax.f32 %v151, 0.0
    %v153 = vsub.f32 %v130, %v148
    %v154 = vadd.f32 %v152, 1e-05
    %v155 = vrsqrt.pop %v154
    %v156 = vmul.f32 %v153, %v155
    %v157 = vld [vmem:[%s2] sm:$0x1]
    %v159 = vlaneseq
    %v160 = vshrl.u32 %v159, 7
    %v161 = vsub.s32 0, %v160
    %v162 = vrot.slane %v157, %v161
    %v164 = vmul.f32 %v156, %v162
    %v165 = vld [vmem:[%s3] sm:$0x1]
    %v167 = vlaneseq
    %v168 = vshrl.u32 %v167, 7
    %v169 = vsub.s32 0, %v168
    %v170 = vrot.slane %v165, %v169
    %v172 = vadd.f32 %v164, %v170
    %v173 = vmax.f32 %v172, 0.0
    %v174 = vld [vmem:[#allocation2] sm:$0xff]
    %v175 = vpack.c.bf16 %v173, %v173
    %v176 = vld [vmem:[%s4] sm:$0xf]
    %v177 = vld [vmem:[%s4 + $0x4] sm:$0xf]
    %v178 = vld [vmem:[%s4 + $0x8] sm:$0xf]
    %v179 = vld [vmem:[%s4 + $0xc] sm:$0xf]
    %v180 = vld [vmem:[%s4 + $0x10] sm:$0xf]
    %v181 = vld [vmem:[%s4 + $0x14] sm:$0xf]
    %v182 = vld [vmem:[%s4 + $0x18] sm:$0xf]
    %v183 = vld [vmem:[%s4 + $0x1c] sm:$0xf]
    %v184 = vld [vmem:[%s4 + $0x20] sm:$0xf]
    %v185 = vld [vmem:[%s4 + $0x24] sm:$0xf]
    %v186 = vld [vmem:[%s4 + $0x28] sm:$0xf]
    %v187 = vld [vmem:[%s4 + $0x2c] sm:$0xf]
    %v188 = vld [vmem:[%s4 + $0x30] sm:$0xf]
    %v189 = vld [vmem:[%s4 + $0x34] sm:$0xf]
    %v190 = vld [vmem:[%s4 + $0x38] sm:$0xf]
    %v191 = vld [vmem:[%s4 + $0x3c] sm:$0xf]
    %v208 = vunpack.c.l.b16 %v176
    %v209 = vunpack.c.l.b16 %v177
    %v210 = vunpack.c.l.b16 %v178
    %v211 = vunpack.c.l.b16 %v179
    %v212 = vunpack.c.l.b16 %v180
    %v213 = vunpack.c.l.b16 %v181
    %v214 = vunpack.c.l.b16 %v182
    %v215 = vunpack.c.l.b16 %v183
    %v216 = vunpack.c.l.b16 %v184
    %v217 = vunpack.c.l.b16 %v185
    %v218 = vunpack.c.l.b16 %v186
    %v219 = vunpack.c.l.b16 %v187
    %v220 = vunpack.c.l.b16 %v188
    %v221 = vunpack.c.l.b16 %v189
    %v222 = vunpack.c.l.b16 %v190
    %v223 = vunpack.c.l.b16 %v191
    %v224 = vpack.c.b16 %v209, %v208
    %v225 = vpack.c.b16 %v211, %v210
    %v226 = vpack.c.b16 %v213, %v212
    %v227 = vpack.c.b16 %v215, %v214
    %v228 = vpack.c.b16 %v217, %v216
    %v229 = vpack.c.b16 %v219, %v218
    %v230 = vpack.c.b16 %v221, %v220
    %v231 = vpack.c.b16 %v223, %v222
    %240 = vmatprep.subr.bf16.mxu0 0
    %241 = vmatpush1.bf16.msra.mxu0 %v231
    %242 = vmatprep.subr.bf16.mxu0 0
    %243 = vmatpush1.bf16.msra.mxu0 %v230
    %244 = vmatprep.subr.bf16.mxu0 0
    %245 = vmatpush1.bf16.msra.mxu0 %v229
    %246 = vmatprep.subr.bf16.mxu0 0
    %247 = vmatpush1.bf16.msra.mxu0 %v228
    %248 = vmatprep.subr.bf16.mxu0 0
    %249 = vmatpush1.bf16.msra.mxu0 %v227
    %250 = vmatprep.subr.bf16.mxu0 0
    %251 = vmatpush1.bf16.msra.mxu0 %v226
    %252 = vmatprep.subr.bf16.mxu0 0
    %253 = vmatpush1.bf16.msra.mxu0 %v225
    %254 = vmatprep.subr.bf16.mxu0 0
    %255 = vmatpush1.bf16.msra.mxu0 %v224
    %256 = vmatprep.subr.bf16.mxu0 0
    %257 = vmatpush2.bf16.msra.mxu0 0
    %258 = vmatprep.subr.bf16.mxu0 0
    %259 = vmatpush2.bf16.msra.mxu0 0
    %260 = vmatprep.subr.bf16.mxu0 0
    %261 = vmatpush2.bf16.msra.mxu0 0
    %262 = vmatprep.subr.bf16.mxu0 0
    %263 = vmatpush2.bf16.msra.mxu0 0
    %264 = vmatprep.subr.bf16.mxu0 0
    %265 = vmatpush2.bf16.msra.mxu0 0
    %266 = vmatprep.subr.bf16.mxu0 0
    %267 = vmatpush2.bf16.msra.mxu0 0
    %268 = vmatprep.subr.bf16.mxu0 0
    %269 = vmatpush2.bf16.msra.mxu0 0
    %270 = vmatprep.subr.bf16.mxu0 0
    %271 = vmatpush2.bf16.msra.mxu0 0
    %272 = vmatprep.mubr.bf16.mxu0 0
    %273 = vmatmul.mubr.bf16.gmra.mxu0 %v175
    %v274 = vpop.f32.mrf.mxu0
    %v275 = vadd.f32 0.0, %v274
    %v276 = vpop.f32.mrf.mxu0
    %v277 = vpop.f32.mrf.mxu0
    %v278 = vpop.f32.mrf.mxu0
    %279 = vdwg.mxu0
    %v280 = vadd.f32 %v174, %v275
    %281 = vst [vmem:[#allocation2] sm:$0xff] %v280
    // Predicated region
    $region30: #{mlp_head_forward.1} parent=1 // pred_check
      %p282 = pneg %p25
    $region31: #{mlp_head_forward.1} parent=1 // pred_check_branch
      %284 = sbr.rel (%p282) target = $region33
    $region32: #{mlp_head_forward.1} parent=1 // pred_region
      %v285 = vld [vmem:[#allocation2] sm:$0xff]
      %v286 = vld [vmem:[%s5] sm:$0x1]
      %v288 = vlaneseq
      %v289 = vshrl.u32 %v288, 7
      %v290 = vsub.s32 0, %v289
      %v291 = vrot.slane %v286, %v290
      %v293 = vadd.f32 %v285, %v291
      %294 = vst [vmem:[#allocation3] sm:$0xff] %v293
    $region33: #{mlp_head_forward.1} parent=1 // pred_fallthru
      _
    // Predicated region
    $region34: #{mlp_head_forward.1} parent=1 // pred_check
      _
    $region35: #{mlp_head_forward.1} parent=1 // pred_check_branch
      %296 = sbr.rel (0) target = $region37
    $region36: #{mlp_head_forward.1} parent=1 // pred_region
      %s298 = ssub.s32 128, 128
      %299 = vsyncadd [#allocation4], %s298
      %s301 = sshll.u32 [#allocation3], 4
      %s302 = int_to_ptr.vmem [resolvable:$true] %s301
      %304 = dma.vmem_to_hbm [thread:$0]  %s302, 128, %s6, [#allocation4]
    $region37: #{mlp_head_forward.1} parent=1 // pred_fallthru
      _
    // Predicated region
    $region38: #{mlp_head_forward.1} parent=1 // pred_check
      _
    $region39: #{mlp_head_forward.1} parent=1 // pred_check_branch
      %306 = sbr.rel (0) target = $region41
    $region40: #{mlp_head_forward.1} parent=1 // pred_region
      %307 = dma.done [#allocation4], 128
    $region41: #{mlp_head_forward.1} parent=1 // pred_fallthru
      _
    %308 = vsyncpa [#allocation4], 1

</llo_original>
